<compile_context>
chip_gen: v6e
topology: v6e:2x2x1
jax: 0.10.0
libtpu: 0.0.40
codegen_flags: <defaults>
</compile_context>

<pallas_src>
import jax
import jax.numpy as jnp
from jax.experimental import pallas as pl
from jax.experimental.pallas import tpu as pltpu


# ----------------------------------------------------------------------------
# Kernels
# ----------------------------------------------------------------------------
def _mlp2_fused_kernel(x_ref, w1_ref, b1_ref, w2_ref, b2_ref, o_ref):
    # fc1: (TB, Dp) @ (Dp, Hp) on the MXU, bf16 operands, f32 accumulation.
    h = jnp.dot(x_ref[...], w1_ref[...], preferred_element_type=jnp.float32)
    h = jnp.maximum(h + b1_ref[...], 0.0)          # bias + ReLU (VPU)
    # fc2: deliberate bf16 downcast of the fc1 activation for the 2nd MXU pass.
    y = jnp.dot(h.astype(jnp.bfloat16), w2_ref[...],
                preferred_element_type=jnp.float32)
    o_ref[...] = (y + b2_ref[...]).astype(o_ref.dtype)


def _mlp2_htiled_kernel(x_ref, w1_ref, b1_ref, w2_ref, b2_ref, o_ref, acc_ref):
    # Hidden-dim-tiled variant: grid = (batch tiles, H chunks); the H axis is
    # a reduction into an f32 VMEM accumulator.
    h_idx = pl.program_id(1)

    @pl.when(h_idx == 0)
    def _init():
        acc_ref[...] = jnp.zeros_like(acc_ref)

    # fc1 chunk: (TB, Dp) @ (Dp, TH) -> bias + ReLU -> fc2 partial
    # (TB, TH) @ (TH, Cp) accumulated in f32.
    h = jnp.dot(x_ref[...], w1_ref[...], preferred_element_type=jnp.float32)
    h = jnp.maximum(h + b1_ref[...], 0.0)
    acc_ref[...] += jnp.dot(h.astype(jnp.bfloat16), w2_ref[...],
                            preferred_element_type=jnp.float32)

    @pl.when(h_idx == pl.num_programs(1) - 1)
    def _finalize():
        o_ref[...] = (acc_ref[...] + b2_ref[...]).astype(o_ref.dtype)


# ----------------------------------------------------------------------------
# Tiling / VMEM-budget helpers
# ----------------------------------------------------------------------------
_LANE = 128                 # lane width / v5e MXU tile
_MXU = 256                  # v6e / v7x MXU tile
_SUBLANE_BF16 = 16          # bf16 min sublane packing
_VMEM_BUDGET = 48 << 20     # conservative: fits v7x's 64 MiB/TC with headroom
_VMEM_LIMIT_CAP = 64 << 20


def _round_up(n, m):
    return ((n + m - 1) // m) * m


def _lane_pad(n):
    # 256-aligned for the v6e/v7x MXU once the dim exceeds 128; 128 otherwise.
    return _round_up(n, _MXU) if n > _LANE else _LANE


def _pad2(a, rows, cols):
    return jnp.pad(a, ((0, rows - a.shape[0]), (0, cols - a.shape[1])))


def _pick_tb(batch, block_b):
    block_b = max(_SUBLANE_BF16, (block_b // _SUBLANE_BF16) * _SUBLANE_BF16)
    if batch < 32:
        return _round_up(batch, _SUBLANE_BF16)
    # Guarantee >= 2 grid steps so the "parallel" batch axis shards across
    # both v7x TensorCores (no cost on single-TC v5e/v6e).
    return min(block_b, _round_up((batch + 1) // 2, _SUBLANE_BF16))


def _fused_vmem_bytes(tb, dp, hp, cp, weight_bufs=2):
    weights = (dp * hp + hp * cp) * 2 * weight_bufs        # bf16 weights
    biases = (hp + cp) * 4 * weight_bufs                   # f32 biases
    acts = 2 * tb * dp * 2                                 # x, double-buffered bf16
    outs = 2 * tb * cp * 4                                 # out, double-buffered f32
    inter = tb * hp * 4                                    # f32 fc1 activation
    return weights + biases + acts + outs + inter


def _htiled_vmem_bytes(tb, dp, th, cp):
    weights = 2 * (dp * th + th * cp) * 2                  # bf16 chunks, 2 bufs
    biases = 2 * th * 4 + cp * 4
    acts = 2 * tb * dp * 2
    outs = 2 * tb * cp * 4
    acc = tb * cp * 4
    inter = tb * th * 4
    return weights + biases + acts + outs + acc + inter


def _pick_th(tb, dp, hp, cp):
    for th in (2048, 1024, 512, 256, 128):
        if hp % th == 0 and _htiled_vmem_bytes(tb, dp, th, cp) <= _VMEM_BUDGET:
            return th
    # TODO(synk): for extreme D/C this still needs D- or C-tiling; cap at 128.
    return _LANE


# ----------------------------------------------------------------------------
# Parameter preparation (hoisted out of the per-call wrapper)
# ----------------------------------------------------------------------------
def prepare_mlp2_params(w1, b1, w2, b2):
    """Pad + cast MLP2 parameters ONCE (not per forward call).

    w1: (D_in, H), b1: (H,) or (1, H), w2: (H, C), b2: (C,) or (1, C).
    Weights are stored as (in_features, out_features) bf16, lane-padded;
    biases stay f32 (added to the f32 accumulator inside the kernel).
    """
    b1 = jnp.asarray(b1).reshape(1, -1)
    b2 = jnp.asarray(b2).reshape(1, -1)
    D_in, H = w1.shape
    C = w2.shape[1]
    Dp, Hp, Cp = _lane_pad(D_in), _lane_pad(H), _lane_pad(C)
    return {
        "w1": _pad2(w1, Dp, Hp).astype(jnp.bfloat16),
        "b1": _pad2(b1, 1, Hp).astype(jnp.float32),
        "w2": _pad2(w2, Hp, Cp).astype(jnp.bfloat16),
        "b2": _pad2(b2, 1, Cp).astype(jnp.float32),
        "dims": (D_in, H, C),
        "padded": (Dp, Hp, Cp),
    }


# ----------------------------------------------------------------------------
# pallas_call builders
# ----------------------------------------------------------------------------
def _fused_call(xp, params, *, TB, Bp, Dp, Hp, Cp, out_dtype, cost):
    grid = (Bp // TB,)
    args = (xp, params["w1"], params["b1"], params["w2"], params["b2"])

    def build(single_buffer_weights):
        wkw = ({"pipeline_mode": pl.Buffered(1)} if single_buffer_weights
               else {})
        weight_bufs = 1 if single_buffer_weights else 2
        vmem_limit = int(min(
            _VMEM_LIMIT_CAP,
            max(32 << 20,
                _fused_vmem_bytes(TB, Dp, Hp, Cp, weight_bufs) + (8 << 20))))
        return pl.pallas_call(
            _mlp2_fused_kernel,
            out_shape=jax.ShapeDtypeStruct((Bp, Cp), out_dtype),
            grid=grid,
            in_specs=[
                pl.BlockSpec((TB, Dp), lambda i: (i, 0)),          # x: tiled
                pl.BlockSpec((Dp, Hp), lambda i: (0, 0), **wkw),   # w1 resident
                pl.BlockSpec((1, Hp), lambda i: (0, 0), **wkw),    # b1 resident
                pl.BlockSpec((Hp, Cp), lambda i: (0, 0), **wkw),   # w2 resident
                pl.BlockSpec((1, Cp), lambda i: (0, 0), **wkw),    # b2 resident
            ],
            out_specs=pl.BlockSpec((TB, Cp), lambda i: (i, 0)),
            compiler_params=pltpu.CompilerParams(
                dimension_semantics=("parallel",),
                vmem_limit_bytes=vmem_limit),
            cost_estimate=cost,
        )

    try:
        return build(True)(*args)
    except Exception:
        # pipeline_mode=pl.Buffered(1) not supported by this build; fall back
        # to default double-buffering (VMEM budget already assumes 2 bufs).
        return build(False)(*args)


def _htiled_call(xp, params, *, TB, Bp, Dp, Hp, Cp, TH, out_dtype, cost):
    grid = (Bp // TB, Hp // TH)   # reduction (H) axis last
    vmem_limit = int(min(
        _VMEM_LIMIT_CAP,
        max(32 << 20, _htiled_vmem_bytes(TB, Dp, TH, Cp) + (8 << 20))))
    return pl.pallas_call(
        _mlp2_htiled_kernel,
        out_shape=jax.ShapeDtypeStruct((Bp, Cp), out_dtype),
        grid=grid,
        in_specs=[
            pl.BlockSpec((TB, Dp), lambda i, h: (i, 0)),   # x: resident over H
            pl.BlockSpec((Dp, TH), lambda i, h: (0, h)),   # w1 chunk
            pl.BlockSpec((1, TH), lambda i, h: (0, h)),    # b1 chunk
            pl.BlockSpec((TH, Cp), lambda i, h: (h, 0)),   # w2 chunk
            pl.BlockSpec((1, Cp), lambda i, h: (0, 0)),    # b2 resident
        ],
        out_specs=pl.BlockSpec((TB, Cp), lambda i, h: (i, 0)),
        scratch_shapes=[pltpu.VMEM((TB, Cp), jnp.float32)],
        compiler_params=pltpu.CompilerParams(
            dimension_semantics=("parallel", "arbitrary"),
            vmem_limit_bytes=vmem_limit),
        cost_estimate=cost,
    )(xp, params["w1"], params["b1"], params["w2"], params["b2"])


# ----------------------------------------------------------------------------
# Forward wrapper
# ----------------------------------------------------------------------------
def mlp2_forward(x, params, *, block_b=256, h_block=None,
                 out_dtype=jnp.float32):
    """MLP2 forward: relu(x @ w1 + b1) @ w2 + b2.

    `params` must come from prepare_mlp2_params (padding/casting hoisted).
    `h_block` forces the hidden-dim-tiled (reduction) path with that chunk.
    Set out_dtype=jnp.bfloat16 if downstream accepts bf16 (halves store DMA).
    """
    D_in, H, C = params["dims"]
    Dp, Hp, Cp = params["padded"]
    B = x.shape[0]
    assert x.shape[1] == D_in, "input feature dim mismatch"

    TB = _pick_tb(B, block_b)
    Bp = _round_up(B, TB)
    xp = _pad2(x.astype(jnp.bfloat16), Bp, Dp)

    flops = 2 * Bp * Hp * (Dp + Cp)
    bytes_accessed = (Bp * Dp * 2 + Dp * Hp * 2 + Hp * 4 + Hp * Cp * 2
                      + Cp * 4 + Bp * Cp * jnp.dtype(out_dtype).itemsize)
    cost = pl.CostEstimate(flops=flops, transcendentals=0,
                           bytes_accessed=bytes_accessed)

    use_htiled = (h_block is not None
                  or _fused_vmem_bytes(TB, Dp, Hp, Cp) > _VMEM_BUDGET)

    if not use_htiled:
        out = _fused_call(xp, params, TB=TB, Bp=Bp, Dp=Dp, Hp=Hp, Cp=Cp,
                          out_dtype=out_dtype, cost=cost)
    else:
        if h_block is not None:
            TH = min(_round_up(h_block, _LANE), Hp)
            if Hp % TH != 0:
                TH = _LANE
        else:
            TH = _pick_th(TB, Dp, Hp, Cp)
        out = _htiled_call(xp, params, TB=TB, Bp=Bp, Dp=Dp, Hp=Hp, Cp=Cp,
                           TH=TH, out_dtype=out_dtype, cost=cost)
    return out[:B, :C]


# ----------------------------------------------------------------------------
# Init + reference + self-test
# ----------------------------------------------------------------------------
def init_linear(key, in_features, out_features):
    """torch.nn.Linear-style U(-1/sqrt(in), 1/sqrt(in)) init.

    Weight is returned already transposed to (in_features, out_features);
    bias is a (1, out_features) row.
    """
    k_w, k_b = jax.random.split(key)
    bound = 1.0 / jnp.sqrt(jnp.float32(in_features))
    w = jax.random.uniform(k_w, (in_features, out_features),
                           dtype=jnp.float32, minval=-bound, maxval=bound)
    b = jax.random.uniform(k_b, (1, out_features),
                           dtype=jnp.float32, minval=-bound, maxval=bound)
    return w, b


def _reference(x, w1, b1, w2, b2):
    # Pure-JAX reference on the same bf16-operand / f32-accumulate path.
    xb, w1b, w2b = (a.astype(jnp.bfloat16) for a in (x, w1, w2))
    h = jnp.maximum(
        jnp.dot(xb, w1b, preferred_element_type=jnp.float32) + b1, 0.0)
    return jnp.dot(h.astype(jnp.bfloat16), w2b,
                   preferred_element_type=jnp.float32) + b2


if __name__ == "__main__":
    key = jax.random.PRNGKey(0)

    # --- Test 1: module's nominal sizes (fused, fully VMEM-resident path) ---
    input_size, hidden_size, out_classes, batch = 32, 64, 16, 8
    k_x, k_fc1, k_inter, k_fc2, k_rest = jax.random.split(key, 5)

    x = jax.random.normal(k_x, (batch, input_size), dtype=jnp.float32)
    w1, b1 = init_linear(k_fc1, input_size, hidden_size)
    # `self.inter` exists in __init__ but is unused in forward(); params kept
    # only to mirror the module definition.
    w_inter, b_inter = init_linear(k_inter, hidden_size, hidden_size)
    w2, b2 = init_linear(k_fc2, hidden_size, out_classes)

    params = prepare_mlp2_params(w1, b1, w2, b2)   # pad/cast once, reuse
    out = jax.block_until_ready(mlp2_forward(x, params))
    ref = _reference(x, w1, b1, w2, b2)
    assert out.shape == (batch, out_classes)
    assert jnp.allclose(out, ref, atol=2e-2, rtol=2e-2)

    # --- Test 2: exercise the H-tiled reduction path + multi-step batch grid ---
    k_x2, k_fc1b, k_fc2b = jax.random.split(k_rest, 3)
    B2, D2, H2, C2 = 64, 48, 256, 24
    x2 = jax.random.normal(k_x2, (B2, D2), dtype=jnp.float32)
    w1b_, b1b_ = init_linear(k_fc1b, D2, H2)
    w2b_, b2b_ = init_linear(k_fc2b, H2, C2)
    params2 = prepare_mlp2_params(w1b_, b1b_, w2b_, b2b_)
    out2 = jax.block_until_ready(mlp2_forward(x2, params2, h_block=128))
    ref2 = _reference(x2, w1b_, b1b_, w2b_, b2b_)
    assert out2.shape == (B2, C2)
    assert jnp.allclose(out2, ref2, atol=2e-2, rtol=2e-2)

    print("KERNEL_OK")
</pallas_src>

<mosaic_0001>
module attributes {stable_mosaic.version = 11 : i64} {
  func.func @_mlp2_fused_kernel(%arg0: i32, %arg1: memref<16x128xbf16, #tpu.memory_space<vmem>>, %arg2: memref<128x128xbf16, #tpu.memory_space<vmem>>, %arg3: memref<1x128xf32, #tpu.memory_space<vmem>>, %arg4: memref<128x128xbf16, #tpu.memory_space<vmem>>, %arg5: memref<1x128xf32, #tpu.memory_space<vmem>>, %arg6: memref<16x128xf32, #tpu.memory_space<vmem>>) attributes {dimension_semantics = [#tpu.dimension_semantics<parallel>], iteration_bounds = array<i64: 1>, scalar_prefetch = 0 : i64, scratch_operands = 0 : i64, tpu.core_type = #tpu.core_type<tc>, window_params = [{transform_indices = @transform_0, window_bounds = array<i64: 16, 128>}, {pipeline_mode = #tpu.pipeline_mode<synchronous>, transform_indices = @transform_1, window_bounds = array<i64: 128, 128>}, {pipeline_mode = #tpu.pipeline_mode<synchronous>, transform_indices = @transform_2, window_bounds = array<i64: 1, 128>}, {pipeline_mode = #tpu.pipeline_mode<synchronous>, transform_indices = @transform_3, window_bounds = array<i64: 128, 128>}, {pipeline_mode = #tpu.pipeline_mode<synchronous>, transform_indices = @transform_4, window_bounds = array<i64: 1, 128>}, {transform_indices = @transform_5, window_bounds = array<i64: 16, 128>}]} {
    %c0 = arith.constant 0 : index
    %c0_0 = arith.constant 0 : index
    %0 = vector.load %arg1[%c0, %c0_0] : memref<16x128xbf16, #tpu.memory_space<vmem>>, vector<16x128xbf16>
    %c0_1 = arith.constant 0 : index
    %c0_2 = arith.constant 0 : index
    %1 = vector.load %arg2[%c0_1, %c0_2] : memref<128x128xbf16, #tpu.memory_space<vmem>>, vector<128x128xbf16>
    %cst = arith.constant dense<0.000000e+00> : vector<16x128xf32>
    %2 = tpu.matmul %0, %1, %cst {dimension_numbers = #tpu.dot_dimension_numbers<[1], [0], [0], [1], [0, 0, 1, 1], [], []>} : vector<16x128xbf16>, vector<128x128xbf16>, vector<16x128xf32> -> vector<16x128xf32>
    %c0_3 = arith.constant 0 : index
    %c0_4 = arith.constant 0 : index
    %3 = vector.load %arg3[%c0_3, %c0_4] : memref<1x128xf32, #tpu.memory_space<vmem>>, vector<1x128xf32>
    %4 = vector.broadcast %3 : vector<1x128xf32> to vector<16x128xf32>
    %5 = arith.addf %2, %4 : vector<16x128xf32>
    %cst_5 = arith.constant 0.000000e+00 : f32
    %6 = vector.broadcast %cst_5 : f32 to vector<16x128xf32>
    %7 = arith.maximumf %5, %6 : vector<16x128xf32>
    %8 = arith.truncf %7 : vector<16x128xf32> to vector<16x128xbf16>
    %c0_6 = arith.constant 0 : index
    %c0_7 = arith.constant 0 : index
    %9 = vector.load %arg4[%c0_6, %c0_7] : memref<128x128xbf16, #tpu.memory_space<vmem>>, vector<128x128xbf16>
    %cst_8 = arith.constant dense<0.000000e+00> : vector<16x128xf32>
    %10 = tpu.matmul %8, %9, %cst_8 {dimension_numbers = #tpu.dot_dimension_numbers<[1], [0], [0], [1], [0, 0, 1, 1], [], []>} : vector<16x128xbf16>, vector<128x128xbf16>, vector<16x128xf32> -> vector<16x128xf32>
    %c0_9 = arith.constant 0 : index
    %c0_10 = arith.constant 0 : index
    %11 = vector.load %arg5[%c0_9, %c0_10] : memref<1x128xf32, #tpu.memory_space<vmem>>, vector<1x128xf32>
    %12 = vector.broadcast %11 : vector<1x128xf32> to vector<16x128xf32>
    %13 = arith.addf %10, %12 : vector<16x128xf32>
    %c0_11 = arith.constant 0 : index
    %c0_12 = arith.constant 0 : index
    %14 = vector.load %arg6[%c0_11, %c0_12] : memref<16x128xf32, #tpu.memory_space<vmem>>, vector<16x128xf32>
    tpu.vector_store %arg6[%c0_11, %c0_12], %13 {strides = array<i32>} : memref<16x128xf32, #tpu.memory_space<vmem>>, vector<16x128xf32>,
    return
  }
  func.func @transform_0(%arg0: i32) -> (i32, i32) {
    %c0_i32 = arith.constant 0 : i32
    %c0_i32_0 = arith.constant 0 : i32
    return %arg0, %c0_i32 : i32, i32
  }
  func.func @transform_1(%arg0: i32) -> (i32, i32) {
    %c0_i32 = arith.constant 0 : i32
    %c0_i32_0 = arith.constant 0 : i32
    %c0_i32_1 = arith.constant 0 : i32
    return %c0_i32, %c0_i32_0 : i32, i32
  }
  func.func @transform_2(%arg0: i32) -> (i32, i32) {
    %c0_i32 = arith.constant 0 : i32
    %c0_i32_0 = arith.constant 0 : i32
    %c0_i32_1 = arith.constant 0 : i32
    return %c0_i32, %c0_i32_0 : i32, i32
  }
  func.func @transform_3(%arg0: i32) -> (i32, i32) {
    %c0_i32 = arith.constant 0 : i32
    %c0_i32_0 = arith.constant 0 : i32
    %c0_i32_1 = arith.constant 0 : i32
    return %c0_i32, %c0_i32_0 : i32, i32
  }
  func.func @transform_4(%arg0: i32) -> (i32, i32) {
    %c0_i32 = arith.constant 0 : i32
    %c0_i32_0 = arith.constant 0 : i32
    %c0_i32_1 = arith.constant 0 : i32
    return %c0_i32, %c0_i32_0 : i32, i32
  }
  func.func @transform_5(%arg0: i32) -> (i32, i32) {
    %c0_i32 = arith.constant 0 : i32
    %c0_i32_0 = arith.constant 0 : i32
    return %arg0, %c0_i32 : i32, i32
  }
}

module attributes {stable_mosaic.version = 11 : i64} {
  func.func @_mlp2_fused_kernel(%arg0: i32, %arg1: memref<16x128xbf16, #tpu.memory_space<vmem>>, %arg2: memref<128x128xbf16, #tpu.memory_space<vmem>>, %arg3: memref<1x128xf32, #tpu.memory_space<vmem>>, %arg4: memref<128x128xbf16, #tpu.memory_space<vmem>>, %arg5: memref<1x128xf32, #tpu.memory_space<vmem>>, %arg6: memref<16x128xf32, #tpu.memory_space<vmem>>) attributes {dimension_semantics = [#tpu.dimension_semantics<parallel>], iteration_bounds = array<i64: 1>, scalar_prefetch = 0 : i64, scratch_operands = 0 : i64, tpu.core_type = #tpu.core_type<tc>, window_params = [{transform_indices = @transform_0, window_bounds = array<i64: 16, 128>}, {pipeline_mode = #tpu.pipeline_mode<synchronous>, transform_indices = @transform_1, window_bounds = array<i64: 128, 128>}, {pipeline_mode = #tpu.pipeline_mode<synchronous>, transform_indices = @transform_2, window_bounds = array<i64: 1, 128>}, {pipeline_mode = #tpu.pipeline_mode<synchronous>, transform_indices = @transform_3, window_bounds = array<i64: 128, 128>}, {pipeline_mode = #tpu.pipeline_mode<synchronous>, transform_indices = @transform_4, window_bounds = array<i64: 1, 128>}, {transform_indices = @transform_5, window_bounds = array<i64: 16, 128>}]} {
    %c0 = arith.constant 0 : index
    %c0_0 = arith.constant 0 : index
    %0 = vector.load %arg1[%c0, %c0_0] : memref<16x128xbf16, #tpu.memory_space<vmem>>, vector<16x128xbf16>
    %c0_1 = arith.constant 0 : index
    %c0_2 = arith.constant 0 : index
    %1 = vector.load %arg2[%c0_1, %c0_2] : memref<128x128xbf16, #tpu.memory_space<vmem>>, vector<128x128xbf16>
    %cst = arith.constant dense<0.000000e+00> : vector<16x128xf32>
    %2 = tpu.matmul %0, %1, %cst {dimension_numbers = #tpu.dot_dimension_numbers<[1], [0], [0], [1], [0, 0, 1, 1], [], []>} : vector<16x128xbf16>, vector<128x128xbf16>, vector<16x128xf32> -> vector<16x128xf32>
    %c0_3 = arith.constant 0 : index
    %c0_4 = arith.constant 0 : index
    %3 = vector.load %arg3[%c0_3, %c0_4] : memref<1x128xf32, #tpu.memory_space<vmem>>, vector<1x128xf32>
    %4 = vector.broadcast %3 : vector<1x128xf32> to vector<16x128xf32>
    %5 = arith.addf %2, %4 : vector<16x128xf32>
    %cst_5 = arith.constant 0.000000e+00 : f32
    %6 = vector.broadcast %cst_5 : f32 to vector<16x128xf32>
    %7 = arith.maximumf %5, %6 : vector<16x128xf32>
    %8 = arith.truncf %7 : vector<16x128xf32> to vector<16x128xbf16>
    %c0_6 = arith.constant 0 : index
    %c0_7 = arith.constant 0 : index
    %9 = vector.load %arg4[%c0_6, %c0_7] : memref<128x128xbf16, #tpu.memory_space<vmem>>, vector<128x128xbf16>
    %cst_8 = arith.constant dense<0.000000e+00> : vector<16x128xf32>
    %10 = tpu.matmul %8, %9, %cst_8 {dimension_numbers = #tpu.dot_dimension_numbers<[1], [0], [0], [1], [0, 0, 1, 1], [], []>} : vector<16x128xbf16>, vector<128x128xbf16>, vector<16x128xf32> -> vector<16x128xf32>
    %c0_9 = arith.constant 0 : index
    %c0_10 = arith.constant 0 : index
    %11 = vector.load %arg5[%c0_9, %c0_10] : memref<1x128xf32, #tpu.memory_space<vmem>>, vector<1x128xf32>
    %12 = vector.broadcast %11 : vector<1x128xf32> to vector<16x128xf32>
    %13 = arith.addf %10, %12 : vector<16x128xf32>
    %c0_11 = arith.constant 0 : index
    %c0_12 = arith.constant 0 : index
    %14 = vector.load %arg6[%c0_11, %c0_12] : memref<16x128xf32, #tpu.memory_space<vmem>>, vector<16x128xf32>
    tpu.vector_store %arg6[%c0_11, %c0_12], %13 {strides = array<i32>} : memref<16x128xf32, #tpu.memory_space<vmem>>, vector<16x128xf32>,
    return
  }
  func.func @transform_0(%arg0: i32) -> (i32, i32) {
    %c0_i32 = arith.constant 0 : i32
    %c0_i32_0 = arith.constant 0 : i32
    return %arg0, %c0_i32 : i32, i32
  }
  func.func @transform_1(%arg0: i32) -> (i32, i32) {
    %c0_i32 = arith.constant 0 : i32
    %c0_i32_0 = arith.constant 0 : i32
    %c0_i32_1 = arith.constant 0 : i32
    return %c0_i32, %c0_i32_0 : i32, i32
  }
  func.func @transform_2(%arg0: i32) -> (i32, i32) {
    %c0_i32 = arith.constant 0 : i32
    %c0_i32_0 = arith.constant 0 : i32
    %c0_i32_1 = arith.constant 0 : i32
    return %c0_i32, %c0_i32_0 : i32, i32
  }
  func.func @transform_3(%arg0: i32) -> (i32, i32) {
    %c0_i32 = arith.constant 0 : i32
    %c0_i32_0 = arith.constant 0 : i32
    %c0_i32_1 = arith.constant 0 : i32
    return %c0_i32, %c0_i32_0 : i32, i32
  }
  func.func @transform_4(%arg0: i32) -> (i32, i32) {
    %c0_i32 = arith.constant 0 : i32
    %c0_i32_0 = arith.constant 0 : i32
    %c0_i32_1 = arith.constant 0 : i32
    return %c0_i32, %c0_i32_0 : i32, i32
  }
  func.func @transform_5(%arg0: i32) -> (i32, i32) {
    %c0_i32 = arith.constant 0 : i32
    %c0_i32_0 = arith.constant 0 : i32
    return %arg0, %c0_i32 : i32, i32
  }
}

</mosaic_0001>

<llo_original>
// kernel: tpu_custom_call.1
$region0: #{tpu_custom_call.1}
  #allocation0 [shape = 'u32[]', space=smem, size = 0x4, offset = 0x4, fixed_abs, tag = 'smem constant byte address 0x4 - core index']
  #allocation1 [shape = 'u32[144,128]{1,0:T(1,128)}', space=vmem, size = 0x12000, scoped, tag = 'internal scratch']
  %s0 = inlined_call_operand.hbm [shape: bf16[16,128], index: 0, kind: input, shape index: {}]
  %s1 = inlined_call_operand.hbm [shape: bf16[128,128], index: 1, kind: input, shape index: {}]
  %s2 = inlined_call_operand.vmem [shape: f32[1,128], index: 2, kind: input, shape index: {}]
  %s3 = inlined_call_operand.hbm [shape: bf16[128,128], index: 3, kind: input, shape index: {}]
  %s4 = inlined_call_operand.vmem [shape: f32[1,128], index: 4, kind: input, shape index: {}]
  %s5 = inlined_call_operand.hbm [shape: f32[16,128], index: 5, kind: output, shape index: {}]
  %s6 = sld [smem:[#allocation0]]
  $region42: #{tpu_custom_call.1} parent=0
    _
  %s8 = ssub.s32 1, %s6
  %s9 = scalar_select 0, %s8, %s6
  $region1: #{tpu_custom_call.1} parent=0
    #allocation2 [shape = 'u8[4096]{0}', space=vmem, size = 0x1000, scoped, tag = 'input window, operand 0, single buffered']
    #allocation3 [shape = 's32[1]{0}', space=sflag, size = 0x4, scoped, tag = 'scoped memory for tpu_custom_call.1']
    #allocation4 [shape = 's32[1]{0}', space=sflag, size = 0x4, scoped, tag = 'scoped memory for tpu_custom_call.1']
    #allocation5 [shape = 'u8[32768]{0}', space=vmem, size = 0x8000, scoped, tag = 'input window, operand 1, single buffered']
    #allocation6 [shape = 's32[1]{0}', space=sflag, size = 0x4, scoped, tag = 'scoped memory for tpu_custom_call.1']
    #allocation7 [shape = 'u8[32768]{0}', space=vmem, size = 0x8000, scoped, tag = 'input window, operand 3, single buffered']
    #allocation8 [shape = 'u8[8192]{0}', space=vmem, size = 0x2000, scoped, tag = 'output window, operand 0, single buffered']
    %10 = vsyncpa [#allocation3], 0
    %11 = vsyncpa [#allocation6], 0
    %12 = vsyncpa [#allocation4], 0
    // Predicated region
    $region2: #{tpu_custom_call.1} parent=1 // pred_check
      _
    $region3: #{tpu_custom_call.1} parent=1 // pred_check_branch
      %14 = sbr.rel (0) target = $region5
    $region4: #{tpu_custom_call.1} parent=1 // pred_region
      %s16 = ssub.s32 128, 128
      %17 = vsyncadd [#allocation3], %s16
      %s18 = sshll.u32 [#allocation2], 4
      %s19 = int_to_ptr.vmem [resolvable:$true] %s18
      %24 = dma.hbm_to_vmem [thread:$0]  %s0, 128, %s19, [#allocation3], 64, 64, 4
    $region5: #{tpu_custom_call.1} parent=1 // pred_fallthru
      _
    // Predicated region
    $region6: #{tpu_custom_call.1} parent=1 // pred_check
      _
    $region7: #{tpu_custom_call.1} parent=1 // pred_check_branch
      %26 = sbr.rel (0) target = $region9
    $region8: #{tpu_custom_call.1} parent=1 // pred_region
      %s28 = ssub.s32 1024, 1024
      %29 = vsyncadd [#allocation6], %s28
      %s30 = sshll.u32 [#allocation5], 4
      %s31 = int_to_ptr.vmem [resolvable:$true] %s30
      %36 = dma.hbm_to_vmem [thread:$0]  %s1, 1024, %s31, [#allocation6], 64, 64, 4
    $region9: #{tpu_custom_call.1} parent=1 // pred_fallthru
      _
    // Predicated region
    $region10: #{tpu_custom_call.1} parent=1 // pred_check
      _
    $region11: #{tpu_custom_call.1} parent=1 // pred_check_branch
      %38 = sbr.rel (0) target = $region13
    $region12: #{tpu_custom_call.1} parent=1 // pred_region
      _
    $region13: #{tpu_custom_call.1} parent=1 // pred_fallthru
      _
    // Predicated region
    $region14: #{tpu_custom_call.1} parent=1 // pred_check
      _
    $region15: #{tpu_custom_call.1} parent=1 // pred_check_branch
      %40 = sbr.rel (0) target = $region17
    $region16: #{tpu_custom_call.1} parent=1 // pred_region
      %s42 = ssub.s32 1024, 1024
      %43 = vsyncadd [#allocation6], %s42
      %s44 = sshll.u32 [#allocation7], 4
      %s45 = int_to_ptr.vmem [resolvable:$true] %s44
      %50 = dma.hbm_to_vmem [thread:$0]  %s3, 1024, %s45, [#allocation6], 64, 64, 4
    $region17: #{tpu_custom_call.1} parent=1 // pred_fallthru
      _
    // Predicated region
    $region18: #{tpu_custom_call.1} parent=1 // pred_check
      _
    $region19: #{tpu_custom_call.1} parent=1 // pred_check_branch
      %52 = sbr.rel (0) target = $region21
    $region20: #{tpu_custom_call.1} parent=1 // pred_region
      _
    $region21: #{tpu_custom_call.1} parent=1 // pred_fallthru
      _
    // Predicated region
    $region22: #{tpu_custom_call.1} parent=1 // pred_check
      _
    $region23: #{tpu_custom_call.1} parent=1 // pred_check_branch
      %54 = sbr.rel (0) target = $region25
    $region24: #{tpu_custom_call.1} parent=1 // pred_region
      %55 = dma.done [#allocation3], 128
    $region25: #{tpu_custom_call.1} parent=1 // pred_fallthru
      _
    // Predicated region
    $region26: #{tpu_custom_call.1} parent=1 // pred_check
      _
    $region27: #{tpu_custom_call.1} parent=1 // pred_check_branch
      %57 = sbr.rel (0) target = $region29
    $region28: #{tpu_custom_call.1} parent=1 // pred_region
      %58 = dma.done [#allocation6], 1024
    $region29: #{tpu_custom_call.1} parent=1 // pred_fallthru
      _
    // Predicated region
    $region30: #{tpu_custom_call.1} parent=1 // pred_check
      _
    $region31: #{tpu_custom_call.1} parent=1 // pred_check_branch
      %60 = sbr.rel (0) target = $region33
    $region32: #{tpu_custom_call.1} parent=1 // pred_region
      %61 = dma.done [#allocation6], 1024
    $region33: #{tpu_custom_call.1} parent=1 // pred_fallthru
      _
    %v63 = vld [vmem:[#allocation2] sm:$0xf]
    %v64 = vld [vmem:[#allocation2 + $0x4] sm:$0xf]
    %v65 = vld [vmem:[#allocation5] sm:$0xf]
    %v66 = vld [vmem:[#allocation5 + $0x4] sm:$0xf]
    %v67 = vld [vmem:[#allocation5 + $0x8] sm:$0xf]
    %v68 = vld [vmem:[#allocation5 + $0xc] sm:$0xf]
    %v69 = vld [vmem:[#allocation5 + $0x10] sm:$0xf]
    %v70 = vld [vmem:[#allocation5 + $0x14] sm:$0xf]
    %v71 = vld [vmem:[#allocation5 + $0x18] sm:$0xf]
    %v72 = vld [vmem:[#allocation5 + $0x1c] sm:$0xf]
    %v73 = vld [vmem:[#allocation5 + $0x20] sm:$0xf]
    %v74 = vld [vmem:[#allocation5 + $0x24] sm:$0xf]
    %v75 = vld [vmem:[#allocation5 + $0x28] sm:$0xf]
    %v76 = vld [vmem:[#allocation5 + $0x2c] sm:$0xf]
    %v77 = vld [vmem:[#allocation5 + $0x30] sm:$0xf]
    %v78 = vld [vmem:[#allocation5 + $0x34] sm:$0xf]
    %v79 = vld [vmem:[#allocation5 + $0x38] sm:$0xf]
    %v80 = vld [vmem:[#allocation5 + $0x3c] sm:$0xf]
    %v81 = vld [vmem:[%s2] sm:$0x1]
    %v83 = vlaneseq
    %v84 = vshrl.u32 %v83, 7
    %v85 = vsub.s32 0, %v84
    %v86 = vrot.slane %v81, %v85
    %v90 = vunpack.c.l.b16 %v63
    %v91 = vunpack.c.l.b16 %v64
    %v92 = vpack.c.b16 %v91, %v90
    %v110 = vunpack.c.l.b16 %v65
    %v111 = vunpack.c.l.b16 %v66
    %v112 = vunpack.c.l.b16 %v67
    %v113 = vunpack.c.l.b16 %v68
    %v114 = vunpack.c.l.b16 %v69
    %v115 = vunpack.c.l.b16 %v70
    %v116 = vunpack.c.l.b16 %v71
    %v117 = vunpack.c.l.b16 %v72
    %v118 = vunpack.c.l.b16 %v73
    %v119 = vunpack.c.l.b16 %v74
    %v120 = vunpack.c.l.b16 %v75
    %v121 = vunpack.c.l.b16 %v76
    %v122 = vunpack.c.l.b16 %v77
    %v123 = vunpack.c.l.b16 %v78
    %v124 = vunpack.c.l.b16 %v79
    %v125 = vunpack.c.l.b16 %v80
    %v126 = vpack.c.b16 %v111, %v110
    %v127 = vpack.c.b16 %v113, %v112
    %v128 = vpack.c.b16 %v115, %v114
    %v129 = vpack.c.b16 %v117, %v116
    %v130 = vpack.c.b16 %v119, %v118
    %v131 = vpack.c.b16 %v121, %v120
    %v132 = vpack.c.b16 %v123, %v122
    %v133 = vpack.c.b16 %v125, %v124
    %142 = vmatprep.subr.bf16.mxu0 0
    %143 = vmatpush1.bf16.msra.mxu0 %v133
    %144 = vmatprep.subr.bf16.mxu0 0
    %145 = vmatpush1.bf16.msra.mxu0 %v132
    %146 = vmatprep.subr.bf16.mxu0 0
    %147 = vmatpush1.bf16.msra.mxu0 %v131
    %148 = vmatprep.subr.bf16.mxu0 0
    %149 = vmatpush1.bf16.msra.mxu0 %v130
    %150 = vmatprep.subr.bf16.mxu0 0
    %151 = vmatpush1.bf16.msra.mxu0 %v129
    %152 = vmatprep.subr.bf16.mxu0 0
    %153 = vmatpush1.bf16.msra.mxu0 %v128
    %154 = vmatprep.subr.bf16.mxu0 0
    %155 = vmatpush1.bf16.msra.mxu0 %v127
    %156 = vmatprep.subr.bf16.mxu0 0
    %157 = vmatpush1.bf16.msra.mxu0 %v126
    %158 = vmatprep.subr.bf16.mxu0 0
    %159 = vmatpush2.bf16.msra.mxu0 0
    %160 = vmatprep.subr.bf16.mxu0 0
    %161 = vmatpush2.bf16.msra.mxu0 0
    %162 = vmatprep.subr.bf16.mxu0 0
    %163 = vmatpush2.bf16.msra.mxu0 0
    %164 = vmatprep.subr.bf16.mxu0 0
    %165 = vmatpush2.bf16.msra.mxu0 0
    %166 = vmatprep.subr.bf16.mxu0 0
    %167 = vmatpush2.bf16.msra.mxu0 0
    %168 = vmatprep.subr.bf16.mxu0 0
    %169 = vmatpush2.bf16.msra.mxu0 0
    %170 = vmatprep.subr.bf16.mxu0 0
    %171 = vmatpush2.bf16.msra.mxu0 0
    %172 = vmatprep.subr.bf16.mxu0 0
    %173 = vmatpush2.bf16.msra.mxu0 0
    %174 = vmatprep.mubr.bf16.mxu0 0
    %175 = vmatmul.mubr.bf16.gmra.mxu0 %v92
    %v176 = vpop.f32.mrf.mxu0
    %v177 = vadd.f32 %v86, %v176
    %v178 = vpop.f32.mrf.mxu0
    %v179 = vpop.f32.mrf.mxu0
    %v180 = vadd.f32 %v86, %v179
    %v181 = vpop.f32.mrf.mxu0
    %182 = vdwg.mxu0
    %v183 = vmax.f32 %v177, 0.0
    %v184 = vmax.f32 %v180, 0.0
    %v185 = vpack.c.bf16 %v184, %v183
    %v186 = vld [vmem:[#allocation7] sm:$0xf]
    %v187 = vld [vmem:[#allocation7 + $0x4] sm:$0xf]
    %v188 = vld [vmem:[#allocation7 + $0x8] sm:$0xf]
    %v189 = vld [vmem:[#allocation7 + $0xc] sm:$0xf]
    %v190 = vld [vmem:[#allocation7 + $0x10] sm:$0xf]
    %v191 = vld [vmem:[#allocation7 + $0x14] sm:$0xf]
    %v192 = vld [vmem:[#allocation7 + $0x18] sm:$0xf]
    %v193 = vld [vmem:[#allocation7 + $0x1c] sm:$0xf]
    %v194 = vld [vmem:[#allocation7 + $0x20] sm:$0xf]
    %v195 = vld [vmem:[#allocation7 + $0x24] sm:$0xf]
    %v196 = vld [vmem:[#allocation7 + $0x28] sm:$0xf]
    %v197 = vld [vmem:[#allocation7 + $0x2c] sm:$0xf]
    %v198 = vld [vmem:[#allocation7 + $0x30] sm:$0xf]
    %v199 = vld [vmem:[#allocation7 + $0x34] sm:$0xf]
    %v200 = vld [vmem:[#allocation7 + $0x38] sm:$0xf]
    %v201 = vld [vmem:[#allocation7 + $0x3c] sm:$0xf]
    %v202 = vld [vmem:[%s4] sm:$0x1]
    %v204 = vlaneseq
    %v205 = vshrl.u32 %v204, 7
    %v206 = vsub.s32 0, %v205
    %v207 = vrot.slane %v202, %v206
    %v225 = vunpack.c.l.b16 %v186
    %v226 = vunpack.c.l.b16 %v187
    %v227 = vunpack.c.l.b16 %v188
    %v228 = vunpack.c.l.b16 %v189
    %v229 = vunpack.c.l.b16 %v190
    %v230 = vunpack.c.l.b16 %v191
    %v231 = vunpack.c.l.b16 %v192
    %v232 = vunpack.c.l.b16 %v193
    %v233 = vunpack.c.l.b16 %v194
    %v234 = vunpack.c.l.b16 %v195
    %v235 = vunpack.c.l.b16 %v196
    %v236 = vunpack.c.l.b16 %v197
    %v237 = vunpack.c.l.b16 %v198
    %v238 = vunpack.c.l.b16 %v199
    %v239 = vunpack.c.l.b16 %v200
    %v240 = vunpack.c.l.b16 %v201
    %v241 = vpack.c.b16 %v226, %v225
    %v242 = vpack.c.b16 %v228, %v227
    %v243 = vpack.c.b16 %v230, %v229
    %v244 = vpack.c.b16 %v232, %v231
    %v245 = vpack.c.b16 %v234, %v233
    %v246 = vpack.c.b16 %v236, %v235
    %v247 = vpack.c.b16 %v238, %v237
    %v248 = vpack.c.b16 %v240, %v239
    %257 = vmatprep.subr.bf16.mxu0 0
    %258 = vmatpush1.bf16.msra.mxu0 %v248
    %259 = vmatprep.subr.bf16.mxu0 0
    %260 = vmatpush1.bf16.msra.mxu0 %v247
    %261 = vmatprep.subr.bf16.mxu0 0
    %262 = vmatpush1.bf16.msra.mxu0 %v246
    %263 = vmatprep.subr.bf16.mxu0 0
    %264 = vmatpush1.bf16.msra.mxu0 %v245
    %265 = vmatprep.subr.bf16.mxu0 0
    %266 = vmatpush1.bf16.msra.mxu0 %v244
    %267 = vmatprep.subr.bf16.mxu0 0
    %268 = vmatpush1.bf16.msra.mxu0 %v243
    %269 = vmatprep.subr.bf16.mxu0 0
    %270 = vmatpush1.bf16.msra.mxu0 %v242
    %271 = vmatprep.subr.bf16.mxu0 0
    %272 = vmatpush1.bf16.msra.mxu0 %v241
    %273 = vmatprep.subr.bf16.mxu0 0
    %274 = vmatpush2.bf16.msra.mxu0 0
    %275 = vmatprep.subr.bf16.mxu0 0
    %276 = vmatpush2.bf16.msra.mxu0 0
    %277 = vmatprep.subr.bf16.mxu0 0
    %278 = vmatpush2.bf16.msra.mxu0 0
    %279 = vmatprep.subr.bf16.mxu0 0
    %280 = vmatpush2.bf16.msra.mxu0 0
    %281 = vmatprep.subr.bf16.mxu0 0
    %282 = vmatpush2.bf16.msra.mxu0 0
    %283 = vmatprep.subr.bf16.mxu0 0
    %284 = vmatpush2.bf16.msra.mxu0 0
    %285 = vmatprep.subr.bf16.mxu0 0
    %286 = vmatpush2.bf16.msra.mxu0 0
    %287 = vmatprep.subr.bf16.mxu0 0
    %288 = vmatpush2.bf16.msra.mxu0 0
    %289 = vmatprep.mubr.bf16.mxu0 0
    %290 = vmatmul.mubr.bf16.gmra.mxu0 %v185
    %v291 = vpop.f32.mrf.mxu0
    %v292 = vadd.f32 %v207, %v291
    %v293 = vpop.f32.mrf.mxu0
    %v294 = vpop.f32.mrf.mxu0
    %v295 = vadd.f32 %v207, %v294
    %v296 = vpop.f32.mrf.mxu0
    %297 = vdwg.mxu0
    %298 = vst [vmem:[#allocation8] sm:$0xff] %v292
    %299 = vst [vmem:[#allocation8 + $0x8] sm:$0xff] %v295
    // Predicated region
    $region34: #{tpu_custom_call.1} parent=1 // pred_check
      _
    $region35: #{tpu_custom_call.1} parent=1 // pred_check_branch
      %301 = sbr.rel (0) target = $region37
    $region36: #{tpu_custom_call.1} parent=1 // pred_region
      %s303 = ssub.s32 256, 256
      %304 = vsyncadd [#allocation4], %s303
      %s305 = sshll.u32 [#allocation8], 4
      %s306 = int_to_ptr.vmem [resolvable:$true] %s305
      %311 = dma.vmem_to_hbm [thread:$0]  %s306, 256, %s5, [#allocation4], 128, 128, 8
    $region37: #{tpu_custom_call.1} parent=1 // pred_fallthru
      _
    // Predicated region
    $region38: #{tpu_custom_call.1} parent=1 // pred_check
      _
    $region39: #{tpu_custom_call.1} parent=1 // pred_check_branch
      %313 = sbr.rel (0) target = $region41
    $region40: #{tpu_custom_call.1} parent=1 // pred_region
      %314 = dma.done [#allocation4], 256
    $region41: #{tpu_custom_call.1} parent=1 // pred_fallthru
      _
    %315 = vsyncpa [#allocation3], 1
    %316 = vsyncpa [#allocation6], 1
    %317 = vsyncpa [#allocation4], 1

// kernel: tpu_custom_call.1
$region0: #{tpu_custom_call.1}
  #allocation0 [shape = 'u32[]', space=smem, size = 0x4, offset = 0x4, fixed_abs, tag = 'smem constant byte address 0x4 - core index']
  #allocation1 [shape = 'u32[144,128]{1,0:T(1,128)}', space=vmem, size = 0x12000, scoped, tag = 'internal scratch']
  %s0 = inlined_call_operand.hbm [shape: bf16[16,128], index: 0, kind: input, shape index: {}]
  %s1 = inlined_call_operand.hbm [shape: bf16[128,128], index: 1, kind: input, shape index: {}]
  %s2 = inlined_call_operand.vmem [shape: f32[1,128], index: 2, kind: input, shape index: {}]
  %s3 = inlined_call_operand.hbm [shape: bf16[128,128], index: 3, kind: input, shape index: {}]
  %s4 = inlined_call_operand.vmem [shape: f32[1,128], index: 4, kind: input, shape index: {}]
  %s5 = inlined_call_operand.hbm [shape: f32[16,128], index: 5, kind: output, shape index: {}]
  %s6 = sld [smem:[#allocation0]]
  $region42: #{tpu_custom_call.1} parent=0
    _
  %s8 = ssub.s32 1, %s6
  %s9 = scalar_select 0, %s8, %s6
  $region1: #{tpu_custom_call.1} parent=0
    #allocation2 [shape = 'u8[4096]{0}', space=vmem, size = 0x1000, scoped, tag = 'input window, operand 0, single buffered']
    #allocation3 [shape = 's32[1]{0}', space=sflag, size = 0x4, scoped, tag = 'scoped memory for tpu_custom_call.1']
    #allocation4 [shape = 's32[1]{0}', space=sflag, size = 0x4, scoped, tag = 'scoped memory for tpu_custom_call.1']
    #allocation5 [shape = 'u8[32768]{0}', space=vmem, size = 0x8000, scoped, tag = 'input window, operand 1, single buffered']
    #allocation6 [shape = 's32[1]{0}', space=sflag, size = 0x4, scoped, tag = 'scoped memory for tpu_custom_call.1']
    #allocation7 [shape = 'u8[32768]{0}', space=vmem, size = 0x8000, scoped, tag = 'input window, operand 3, single buffered']
    #allocation8 [shape = 'u8[8192]{0}', space=vmem, size = 0x2000, scoped, tag = 'output window, operand 0, single buffered']
    %10 = vsyncpa [#allocation3], 0
    %11 = vsyncpa [#allocation6], 0
    %12 = vsyncpa [#allocation4], 0
    // Predicated region
    $region2: #{tpu_custom_call.1} parent=1 // pred_check
      _
    $region3: #{tpu_custom_call.1} parent=1 // pred_check_branch
      %14 = sbr.rel (0) target = $region5
    $region4: #{tpu_custom_call.1} parent=1 // pred_region
      %s16 = ssub.s32 128, 128
      %17 = vsyncadd [#allocation3], %s16
      %s18 = sshll.u32 [#allocation2], 4
      %s19 = int_to_ptr.vmem [resolvable:$true] %s18
      %24 = dma.hbm_to_vmem [thread:$0]  %s0, 128, %s19, [#allocation3], 64, 64, 4
    $region5: #{tpu_custom_call.1} parent=1 // pred_fallthru
      _
    // Predicated region
    $region6: #{tpu_custom_call.1} parent=1 // pred_check
      _
    $region7: #{tpu_custom_call.1} parent=1 // pred_check_branch
      %26 = sbr.rel (0) target = $region9
    $region8: #{tpu_custom_call.1} parent=1 // pred_region
      %s28 = ssub.s32 1024, 1024
      %29 = vsyncadd [#allocation6], %s28
      %s30 = sshll.u32 [#allocation5], 4
      %s31 = int_to_ptr.vmem [resolvable:$true] %s30
      %36 = dma.hbm_to_vmem [thread:$0]  %s1, 1024, %s31, [#allocation6], 64, 64, 4
    $region9: #{tpu_custom_call.1} parent=1 // pred_fallthru
      _
    // Predicated region
    $region10: #{tpu_custom_call.1} parent=1 // pred_check
      _
    $region11: #{tpu_custom_call.1} parent=1 // pred_check_branch
      %38 = sbr.rel (0) target = $region13
    $region12: #{tpu_custom_call.1} parent=1 // pred_region
      _
    $region13: #{tpu_custom_call.1} parent=1 // pred_fallthru
      _
    // Predicated region
    $region14: #{tpu_custom_call.1} parent=1 // pred_check
      _
    $region15: #{tpu_custom_call.1} parent=1 // pred_check_branch
      %40 = sbr.rel (0) target = $region17
    $region16: #{tpu_custom_call.1} parent=1 // pred_region
      %s42 = ssub.s32 1024, 1024
      %43 = vsyncadd [#allocation6], %s42
      %s44 = sshll.u32 [#allocation7], 4
      %s45 = int_to_ptr.vmem [resolvable:$true] %s44
      %50 = dma.hbm_to_vmem [thread:$0]  %s3, 1024, %s45, [#allocation6], 64, 64, 4
    $region17: #{tpu_custom_call.1} parent=1 // pred_fallthru
      _
    // Predicated region
    $region18: #{tpu_custom_call.1} parent=1 // pred_check
      _
    $region19: #{tpu_custom_call.1} parent=1 // pred_check_branch
      %52 = sbr.rel (0) target = $region21
    $region20: #{tpu_custom_call.1} parent=1 // pred_region
      _
    $region21: #{tpu_custom_call.1} parent=1 // pred_fallthru
      _
    // Predicated region
    $region22: #{tpu_custom_call.1} parent=1 // pred_check
      _
    $region23: #{tpu_custom_call.1} parent=1 // pred_check_branch
      %54 = sbr.rel (0) target = $region25
    $region24: #{tpu_custom_call.1} parent=1 // pred_region
      %55 = dma.done [#allocation3], 128
    $region25: #{tpu_custom_call.1} parent=1 // pred_fallthru
      _
    // Predicated region
    $region26: #{tpu_custom_call.1} parent=1 // pred_check
      _
    $region27: #{tpu_custom_call.1} parent=1 // pred_check_branch
      %57 = sbr.rel (0) target = $region29
    $region28: #{tpu_custom_call.1} parent=1 // pred_region
      %58 = dma.done [#allocation6], 1024
    $region29: #{tpu_custom_call.1} parent=1 // pred_fallthru
      _
    // Predicated region
    $region30: #{tpu_custom_call.1} parent=1 // pred_check
      _
    $region31: #{tpu_custom_call.1} parent=1 // pred_check_branch
      %60 = sbr.rel (0) target = $region33
    $region32: #{tpu_custom_call.1} parent=1 // pred_region
      %61 = dma.done [#allocation6], 1024
    $region33: #{tpu_custom_call.1} parent=1 // pred_fallthru
      _
    %v63 = vld [vmem:[#allocation2] sm:$0xf]
    %v64 = vld [vmem:[#allocation2 + $0x4] sm:$0xf]
    %v65 = vld [vmem:[#allocation5] sm:$0xf]
    %v66 = vld [vmem:[#allocation5 + $0x4] sm:$0xf]
    %v67 = vld [vmem:[#allocation5 + $0x8] sm:$0xf]
    %v68 = vld [vmem:[#allocation5 + $0xc] sm:$0xf]
    %v69 = vld [vmem:[#allocation5 + $0x10] sm:$0xf]
    %v70 = vld [vmem:[#allocation5 + $0x14] sm:$0xf]
    %v71 = vld [vmem:[#allocation5 + $0x18] sm:$0xf]
    %v72 = vld [vmem:[#allocation5 + $0x1c] sm:$0xf]
    %v73 = vld [vmem:[#allocation5 + $0x20] sm:$0xf]
    %v74 = vld [vmem:[#allocation5 + $0x24] sm:$0xf]
    %v75 = vld [vmem:[#allocation5 + $0x28] sm:$0xf]
    %v76 = vld [vmem:[#allocation5 + $0x2c] sm:$0xf]
    %v77 = vld [vmem:[#allocation5 + $0x30] sm:$0xf]
    %v78 = vld [vmem:[#allocation5 + $0x34] sm:$0xf]
    %v79 = vld [vmem:[#allocation5 + $0x38] sm:$0xf]
    %v80 = vld [vmem:[#allocation5 + $0x3c] sm:$0xf]
    %v81 = vld [vmem:[%s2] sm:$0x1]
    %v83 = vlaneseq
    %v84 = vshrl.u32 %v83, 7
    %v85 = vsub.s32 0, %v84
    %v86 = vrot.slane %v81, %v85
    %v90 = vunpack.c.l.b16 %v63
    %v91 = vunpack.c.l.b16 %v64
    %v92 = vpack.c.b16 %v91, %v90
    %v110 = vunpack.c.l.b16 %v65
    %v111 = vunpack.c.l.b16 %v66
    %v112 = vunpack.c.l.b16 %v67
    %v113 = vunpack.c.l.b16 %v68
    %v114 = vunpack.c.l.b16 %v69
    %v115 = vunpack.c.l.b16 %v70
    %v116 = vunpack.c.l.b16 %v71
    %v117 = vunpack.c.l.b16 %v72
    %v118 = vunpack.c.l.b16 %v73
    %v119 = vunpack.c.l.b16 %v74
    %v120 = vunpack.c.l.b16 %v75
    %v121 = vunpack.c.l.b16 %v76
    %v122 = vunpack.c.l.b16 %v77
    %v123 = vunpack.c.l.b16 %v78
    %v124 = vunpack.c.l.b16 %v79
    %v125 = vunpack.c.l.b16 %v80
    %v126 = vpack.c.b16 %v111, %v110
    %v127 = vpack.c.b16 %v113, %v112
    %v128 = vpack.c.b16 %v115, %v114
    %v129 = vpack.c.b16 %v117, %v116
    %v130 = vpack.c.b16 %v119, %v118
    %v131 = vpack.c.b16 %v121, %v120
    %v132 = vpack.c.b16 %v123, %v122
    %v133 = vpack.c.b16 %v125, %v124
    %142 = vmatprep.subr.bf16.mxu0 0
    %143 = vmatpush1.bf16.msra.mxu0 %v133
    %144 = vmatprep.subr.bf16.mxu0 0
    %145 = vmatpush1.bf16.msra.mxu0 %v132
    %146 = vmatprep.subr.bf16.mxu0 0
    %147 = vmatpush1.bf16.msra.mxu0 %v131
    %148 = vmatprep.subr.bf16.mxu0 0
    %149 = vmatpush1.bf16.msra.mxu0 %v130
    %150 = vmatprep.subr.bf16.mxu0 0
    %151 = vmatpush1.bf16.msra.mxu0 %v129
    %152 = vmatprep.subr.bf16.mxu0 0
    %153 = vmatpush1.bf16.msra.mxu0 %v128
    %154 = vmatprep.subr.bf16.mxu0 0
    %155 = vmatpush1.bf16.msra.mxu0 %v127
    %156 = vmatprep.subr.bf16.mxu0 0
    %157 = vmatpush1.bf16.msra.mxu0 %v126
    %158 = vmatprep.subr.bf16.mxu0 0
    %159 = vmatpush2.bf16.msra.mxu0 0
    %160 = vmatprep.subr.bf16.mxu0 0
    %161 = vmatpush2.bf16.msra.mxu0 0
    %162 = vmatprep.subr.bf16.mxu0 0
    %163 = vmatpush2.bf16.msra.mxu0 0
    %164 = vmatprep.subr.bf16.mxu0 0
    %165 = vmatpush2.bf16.msra.mxu0 0
    %166 = vmatprep.subr.bf16.mxu0 0
    %167 = vmatpush2.bf16.msra.mxu0 0
    %168 = vmatprep.subr.bf16.mxu0 0
    %169 = vmatpush2.bf16.msra.mxu0 0
    %170 = vmatprep.subr.bf16.mxu0 0
    %171 = vmatpush2.bf16.msra.mxu0 0
    %172 = vmatprep.subr.bf16.mxu0 0
    %173 = vmatpush2.bf16.msra.mxu0 0
    %174 = vmatprep.mubr.bf16.mxu0 0
    %175 = vmatmul.mubr.bf16.gmra.mxu0 %v92
    %v176 = vpop.f32.mrf.mxu0
    %v177 = vadd.f32 %v86, %v176
    %v178 = vpop.f32.mrf.mxu0
    %v179 = vpop.f32.mrf.mxu0
    %v180 = vadd.f32 %v86, %v179
    %v181 = vpop.f32.mrf.mxu0
    %182 = vdwg.mxu0
    %v183 = vmax.f32 %v177, 0.0
    %v184 = vmax.f32 %v180, 0.0
    %v185 = vpack.c.bf16 %v184, %v183
    %v186 = vld [vmem:[#allocation7] sm:$0xf]
    %v187 = vld [vmem:[#allocation7 + $0x4] sm:$0xf]
    %v188 = vld [vmem:[#allocation7 + $0x8] sm:$0xf]
    %v189 = vld [vmem:[#allocation7 + $0xc] sm:$0xf]
    %v190 = vld [vmem:[#allocation7 + $0x10] sm:$0xf]
    %v191 = vld [vmem:[#allocation7 + $0x14] sm:$0xf]
    %v192 = vld [vmem:[#allocation7 + $0x18] sm:$0xf]
    %v193 = vld [vmem:[#allocation7 + $0x1c] sm:$0xf]
    %v194 = vld [vmem:[#allocation7 + $0x20] sm:$0xf]
    %v195 = vld [vmem:[#allocation7 + $0x24] sm:$0xf]
    %v196 = vld [vmem:[#allocation7 + $0x28] sm:$0xf]
    %v197 = vld [vmem:[#allocation7 + $0x2c] sm:$0xf]
    %v198 = vld [vmem:[#allocation7 + $0x30] sm:$0xf]
    %v199 = vld [vmem:[#allocation7 + $0x34] sm:$0xf]
    %v200 = vld [vmem:[#allocation7 + $0x38] sm:$0xf]
    %v201 = vld [vmem:[#allocation7 + $0x3c] sm:$0xf]
    %v202 = vld [vmem:[%s4] sm:$0x1]
    %v204 = vlaneseq
    %v205 = vshrl.u32 %v204, 7
    %v206 = vsub.s32 0, %v205
    %v207 = vrot.slane %v202, %v206
    %v225 = vunpack.c.l.b16 %v186
    %v226 = vunpack.c.l.b16 %v187
    %v227 = vunpack.c.l.b16 %v188
    %v228 = vunpack.c.l.b16 %v189
    %v229 = vunpack.c.l.b16 %v190
    %v230 = vunpack.c.l.b16 %v191
    %v231 = vunpack.c.l.b16 %v192
    %v232 = vunpack.c.l.b16 %v193
    %v233 = vunpack.c.l.b16 %v194
    %v234 = vunpack.c.l.b16 %v195
    %v235 = vunpack.c.l.b16 %v196
    %v236 = vunpack.c.l.b16 %v197
    %v237 = vunpack.c.l.b16 %v198
    %v238 = vunpack.c.l.b16 %v199
    %v239 = vunpack.c.l.b16 %v200
    %v240 = vunpack.c.l.b16 %v201
    %v241 = vpack.c.b16 %v226, %v225
    %v242 = vpack.c.b16 %v228, %v227
    %v243 = vpack.c.b16 %v230, %v229
    %v244 = vpack.c.b16 %v232, %v231
    %v245 = vpack.c.b16 %v234, %v233
    %v246 = vpack.c.b16 %v236, %v235
    %v247 = vpack.c.b16 %v238, %v237
    %v248 = vpack.c.b16 %v240, %v239
    %257 = vmatprep.subr.bf16.mxu0 0
    %258 = vmatpush1.bf16.msra.mxu0 %v248
    %259 = vmatprep.subr.bf16.mxu0 0
    %260 = vmatpush1.bf16.msra.mxu0 %v247
    %261 = vmatprep.subr.bf16.mxu0 0
    %262 = vmatpush1.bf16.msra.mxu0 %v246
    %263 = vmatprep.subr.bf16.mxu0 0
    %264 = vmatpush1.bf16.msra.mxu0 %v245
    %265 = vmatprep.subr.bf16.mxu0 0
    %266 = vmatpush1.bf16.msra.mxu0 %v244
    %267 = vmatprep.subr.bf16.mxu0 0
    %268 = vmatpush1.bf16.msra.mxu0 %v243
    %269 = vmatprep.subr.bf16.mxu0 0
    %270 = vmatpush1.bf16.msra.mxu0 %v242
    %271 = vmatprep.subr.bf16.mxu0 0
    %272 = vmatpush1.bf16.msra.mxu0 %v241
    %273 = vmatprep.subr.bf16.mxu0 0
    %274 = vmatpush2.bf16.msra.mxu0 0
    %275 = vmatprep.subr.bf16.mxu0 0
    %276 = vmatpush2.bf16.msra.mxu0 0
    %277 = vmatprep.subr.bf16.mxu0 0
    %278 = vmatpush2.bf16.msra.mxu0 0
    %279 = vmatprep.subr.bf16.mxu0 0
    %280 = vmatpush2.bf16.msra.mxu0 0
    %281 = vmatprep.subr.bf16.mxu0 0
    %282 = vmatpush2.bf16.msra.mxu0 0
    %283 = vmatprep.subr.bf16.mxu0 0
    %284 = vmatpush2.bf16.msra.mxu0 0
    %285 = vmatprep.subr.bf16.mxu0 0
    %286 = vmatpush2.bf16.msra.mxu0 0
    %287 = vmatprep.subr.bf16.mxu0 0
    %288 = vmatpush2.bf16.msra.mxu0 0
    %289 = vmatprep.mubr.bf16.mxu0 0
    %290 = vmatmul.mubr.bf16.gmra.mxu0 %v185
    %v291 = vpop.f32.mrf.mxu0
    %v292 = vadd.f32 %v207, %v291
    %v293 = vpop.f32.mrf.mxu0
    %v294 = vpop.f32.mrf.mxu0
    %v295 = vadd.f32 %v207, %v294
    %v296 = vpop.f32.mrf.mxu0
    %297 = vdwg.mxu0
    %298 = vst [vmem:[#allocation8] sm:$0xff] %v292
    %299 = vst [vmem:[#allocation8 + $0x8] sm:$0xff] %v295
    // Predicated region
    $region34: #{tpu_custom_call.1} parent=1 // pred_check
      _
    $region35: #{tpu_custom_call.1} parent=1 // pred_check_branch
      %301 = sbr.rel (0) target = $region37
    $region36: #{tpu_custom_call.1} parent=1 // pred_region
      %s303 = ssub.s32 256, 256
      %304 = vsyncadd [#allocation4], %s303
      %s305 = sshll.u32 [#allocation8], 4
      %s306 = int_to_ptr.vmem [resolvable:$true] %s305
      %311 = dma.vmem_to_hbm [thread:$0]  %s306, 256, %s5, [#allocation4], 128, 128, 8
    $region37: #{tpu_custom_call.1} parent=1 // pred_fallthru
      _
    // Predicated region
    $region38: #{tpu_custom_call.1} parent=1 // pred_check
      _
    $region39: #{tpu_custom_call.1} parent=1 // pred_check_branch
      %313 = sbr.rel (0) target = $region41
    $region40: #{tpu_custom_call.1} parent=1 // pred_region
      %314 = dma.done [#allocation4], 256
    $region41: #{tpu_custom_call.1} parent=1 // pred_fallthru
      _
    %315 = vsyncpa [#allocation3], 1
    %316 = vsyncpa [#allocation6], 1
    %317 = vsyncpa [#allocation4], 1

</llo_original>
